<compile_context>
chip_gen: v5e
topology: v5e:2x2
jax: 0.10.0
libtpu: 0.0.40
codegen_flags: <defaults>
</compile_context>

<pallas_src>
import functools

import jax
import jax.numpy as jnp
from jax.experimental import pallas as pl
from jax.experimental.pallas import tpu as pltpu


def _suppress2d_kernel(x_ref, bits_ref, o_ref, *, gamma, inv_q, threshold):
    # keep (mask==1)  <=>  uniform uint32 bits < q * 2^32
    keep = bits_ref[...] < jnp.uint32(threshold)
    x = x_ref[...]
    # kept elements -> gamma * x ; suppressed elements -> x / q
    o_ref[...] = jnp.where(keep, x * gamma, x * inv_q)


def suppress2d(x, key, gamma=0.2, p=0.5, training=True, *, tile_rows=512, lanes=512):
    """Suppress2d forward. x: (N, C, H, W) (any shape works; it is flattened)."""
    if not training:
        return x

    q = 1.0 - p
    inv_q = 1.0 / q
    # Integer Bernoulli(q) threshold, clamped to the uint32 range (p=0 edge case).
    threshold = int(round(q * 4294967296.0))
    threshold = max(0, min(threshold, 4294967295))

    orig_shape = x.shape
    total = x.size

    # Lane-dense 2D layout: (rows, L) with L a large multiple of 128.
    L = lanes
    rows = pl.cdiv(total, L)
    tile_r = min(tile_rows, rows)
    if tile_r < rows:
        # block row dim must be a multiple of 8 unless it spans the full dim
        tile_r = max(8, (tile_r // 8) * 8)
    rows_pad = pl.cdiv(rows, tile_r) * tile_r
    padded = rows_pad * L

    x_flat = jnp.ravel(x)
    if padded != total:
        x_flat = jnp.pad(x_flat, (0, padded - total))
    x2 = x_flat.reshape(rows_pad, L)

    # One uint32 of randomness per element (distinct everywhere -> no per-tile
    # repeated-mask problem).
    bits = jax.random.bits(key, (rows_pad, L), dtype=jnp.uint32)

    kernel = functools.partial(
        _suppress2d_kernel, gamma=gamma, inv_q=inv_q, threshold=threshold
    )

    grid = (rows_pad // tile_r,)
    block = pl.BlockSpec((tile_r, L), lambda i: (i, 0))

    out2 = pl.pallas_call(
        kernel,
        out_shape=jax.ShapeDtypeStruct((rows_pad, L), x.dtype),
        grid=grid,
        in_specs=[block, block],
        out_specs=block,
        compiler_params=pltpu.CompilerParams(
            dimension_semantics=("parallel",),
        ),
        cost_estimate=pl.CostEstimate(
            flops=2 * total,
            transcendentals=0,
            bytes_accessed=2 * total * x.dtype.itemsize + 4 * total,
        ),
    )(x2, bits)

    return out2.reshape(-1)[:total].reshape(orig_shape)


if __name__ == "__main__":
    key = jax.random.PRNGKey(0)
    k_x, k_mask = jax.random.split(key)

    # Small NCHW activation consistent with the module: batch=2, channels=4, 16x16 spatial.
    x = jax.random.normal(k_x, (2, 4, 16, 16), dtype=jnp.float32)

    gamma, p = 0.2, 0.5
    q = 1.0 - p

    out = suppress2d(x, k_mask, gamma=gamma, p=p, training=True)
    out = jax.block_until_ready(out)

    # Sanity: every element equals either gamma*x (kept) or x/q (suppressed).
    d_keep = jnp.abs(out - gamma * x)
    d_supp = jnp.abs(out - x * (1.0 / q))
    assert bool(jnp.max(jnp.minimum(d_keep, d_supp)) < 1e-5), (
        "output not consistent with Suppress2d semantics"
    )

    # Roughly q of the elements should be on the gamma branch.
    kept_frac = float(jnp.mean((d_keep <= d_supp).astype(jnp.float32)))
    assert abs(kept_frac - q) < 0.1, f"keep fraction {kept_frac} far from q={q}"

    # Eval mode is the identity.
    out_eval = suppress2d(x, k_mask, gamma=gamma, p=p, training=False)
    assert bool(jnp.all(out_eval == x))

    print("KERNEL_OK")
</pallas_src>

<mosaic_0001>
module attributes {stable_mosaic.version = 11 : i64} {
  func.func @_suppress2d_kernel(%arg0: i32, %arg1: memref<4x512xf32, #tpu.memory_space<vmem>>, %arg2: memref<4x512xi32, #tpu.memory_space<vmem>>, %arg3: memref<4x512xf32, #tpu.memory_space<vmem>>) attributes {dimension_semantics = [#tpu.dimension_semantics<parallel>], iteration_bounds = array<i64: 1>, scalar_prefetch = 0 : i64, scratch_operands = 0 : i64, tpu.core_type = #tpu.core_type<tc>, window_params = [{transform_indices = @transform_0, window_bounds = array<i64: 4, 512>}, {transform_indices = @transform_1, window_bounds = array<i64: 4, 512>}, {transform_indices = @transform_2, window_bounds = array<i64: 4, 512>}]} {
    %c0 = arith.constant 0 : index
    %c0_0 = arith.constant 0 : index
    %0 = vector.load %arg2[%c0, %c0_0] : memref<4x512xi32, #tpu.memory_space<vmem>>, vector<4x512xi32>
    %c-2147483648_i32 = arith.constant -2147483648 : i32
    %1 = vector.broadcast %c-2147483648_i32 : i32 to vector<4x512xi32>
    %2 = arith.cmpi ult, %0, %1 : vector<4x512xi32>
    %c0_1 = arith.constant 0 : index
    %c0_2 = arith.constant 0 : index
    %3 = vector.load %arg1[%c0_1, %c0_2] : memref<4x512xf32, #tpu.memory_space<vmem>>, vector<4x512xf32>
    %cst = arith.constant 2.000000e-01 : f32
    %4 = vector.broadcast %cst : f32 to vector<4x512xf32>
    %5 = arith.mulf %3, %4 : vector<4x512xf32>
    %cst_3 = arith.constant 2.000000e+00 : f32
    %6 = vector.broadcast %cst_3 : f32 to vector<4x512xf32>
    %7 = arith.mulf %3, %6 : vector<4x512xf32>
    %8 = arith.select %2, %5, %7 : vector<4x512xi1>, vector<4x512xf32>
    %c0_4 = arith.constant 0 : index
    %c0_5 = arith.constant 0 : index
    %9 = vector.load %arg3[%c0_4, %c0_5] : memref<4x512xf32, #tpu.memory_space<vmem>>, vector<4x512xf32>
    tpu.vector_store %arg3[%c0_4, %c0_5], %8 {strides = array<i32>} : memref<4x512xf32, #tpu.memory_space<vmem>>, vector<4x512xf32>,
    return
  }
  func.func @transform_0(%arg0: i32) -> (i32, i32) {
    %c0_i32 = arith.constant 0 : i32
    %c0_i32_0 = arith.constant 0 : i32
    return %arg0, %c0_i32 : i32, i32
  }
  func.func @transform_1(%arg0: i32) -> (i32, i32) {
    %c0_i32 = arith.constant 0 : i32
    %c0_i32_0 = arith.constant 0 : i32
    return %arg0, %c0_i32 : i32, i32
  }
  func.func @transform_2(%arg0: i32) -> (i32, i32) {
    %c0_i32 = arith.constant 0 : i32
    %c0_i32_0 = arith.constant 0 : i32
    return %arg0, %c0_i32 : i32, i32
  }
}

</mosaic_0001>

<llo_original>
// kernel: tpu_custom_call.1
$region0: #{tpu_custom_call.1}
  #allocation0 [shape = 'u32[]', space=smem, size = 0x4, offset = 0x4, fixed_abs, tag = 'smem constant byte address 0x4 - core index']
  #allocation1 [shape = 'u32[72,128]{1,0:T(1,128)}', space=vmem, size = 0x9000, scoped, tag = 'internal scratch']
  %s0 = inlined_call_operand.hbm [shape: f32[4,512], index: 0, kind: input, shape index: {}]
  %s1 = inlined_call_operand.hbm [shape: u32[4,512], index: 1, kind: input, shape index: {}]
  %s2 = inlined_call_operand.hbm [shape: f32[4,512], index: 2, kind: output, shape index: {}]
  %s3 = sld [smem:[#allocation0]]
  $region26: #{tpu_custom_call.1} parent=0
    _
  %s5 = ssub.s32 1, %s3
  %s6 = scalar_select 0, %s5, %s3
  $region1: #{tpu_custom_call.1} parent=0
    #allocation2 [shape = 'u8[8192]{0}', space=vmem, size = 0x2000, scoped, tag = 'input window, operand 0, single buffered']
    #allocation3 [shape = 's32[1]{0}', space=sflag, size = 0x4, scoped, tag = 'scoped memory for tpu_custom_call.1']
    #allocation4 [shape = 's32[1]{0}', space=sflag, size = 0x4, scoped, tag = 'scoped memory for tpu_custom_call.1']
    #allocation5 [shape = 'u8[8192]{0}', space=vmem, size = 0x2000, scoped, tag = 'input window, operand 1, single buffered']
    #allocation6 [shape = 's32[1]{0}', space=sflag, size = 0x4, scoped, tag = 'scoped memory for tpu_custom_call.1']
    #allocation7 [shape = 'u8[8192]{0}', space=vmem, size = 0x2000, scoped, tag = 'output window, operand 0, single buffered']
    %7 = vsyncpa [#allocation3], 0
    %8 = vsyncpa [#allocation6], 0
    %9 = vsyncpa [#allocation4], 0
    // Predicated region
    $region2: #{tpu_custom_call.1} parent=1 // pred_check
      _
    $region3: #{tpu_custom_call.1} parent=1 // pred_check_branch
      %11 = sbr.rel (0) target = $region5
    $region4: #{tpu_custom_call.1} parent=1 // pred_region
      %13 = vsyncadd [#allocation3], 0
      %s15 = sshll.u32 %s0, 4
      %s16 = int_to_ptr.hbm [resolvable:$true] %s15
      %s17 = sshll.u32 [#allocation2], 4
      %s18 = int_to_ptr.vmem [resolvable:$true] %s17
      %20 = dma.hbm_to_vmem [thread:$0]  %s16, 256, %s18, [#allocation3]
    $region5: #{tpu_custom_call.1} parent=1 // pred_fallthru
      _
    // Predicated region
    $region6: #{tpu_custom_call.1} parent=1 // pred_check
      _
    $region7: #{tpu_custom_call.1} parent=1 // pred_check_branch
      %22 = sbr.rel (0) target = $region9
    $region8: #{tpu_custom_call.1} parent=1 // pred_region
      %24 = vsyncadd [#allocation6], 0
      %s26 = sshll.u32 %s1, 4
      %s27 = int_to_ptr.hbm [resolvable:$true] %s26
      %s28 = sshll.u32 [#allocation5], 4
      %s29 = int_to_ptr.vmem [resolvable:$true] %s28
      %31 = dma.hbm_to_vmem [thread:$0]  %s27, 256, %s29, [#allocation6]
    $region9: #{tpu_custom_call.1} parent=1 // pred_fallthru
      _
    // Predicated region
    $region10: #{tpu_custom_call.1} parent=1 // pred_check
      _
    $region11: #{tpu_custom_call.1} parent=1 // pred_check_branch
      %33 = sbr.rel (0) target = $region13
    $region12: #{tpu_custom_call.1} parent=1 // pred_region
      %35 = dma.done [#allocation3], 256
    $region13: #{tpu_custom_call.1} parent=1 // pred_fallthru
      _
    // Predicated region
    $region14: #{tpu_custom_call.1} parent=1 // pred_check
      _
    $region15: #{tpu_custom_call.1} parent=1 // pred_check_branch
      %37 = sbr.rel (0) target = $region17
    $region16: #{tpu_custom_call.1} parent=1 // pred_region
      %39 = dma.done [#allocation6], 256
    $region17: #{tpu_custom_call.1} parent=1 // pred_fallthru
      _
    %v40 = vld [vmem:[#allocation5] sm:$0xff]
    %v41 = vld [vmem:[#allocation5 + $0x8] sm:$0xff]
    %v42 = vadd.s32 %v40, 2147483648
    %vm44 = vcmp.lt.s32.totalorder %v42, 0
    %v45 = vadd.s32 %v41, 2147483648
    %vm47 = vcmp.lt.s32.totalorder %v45, 0
    %v48 = vld [vmem:[#allocation2] sm:$0xff]
    %v49 = vld [vmem:[#allocation2 + $0x8] sm:$0xff]
    %v50 = vmul.f32 %v48, 0.2
    %v51 = vmul.f32 %v49, 0.2
    %v52 = vmul.f32 %v48, 2.0
    %v53 = vmul.f32 %v49, 2.0
    %v54 = vsel %vm44, %v50, %v52
    %v55 = vsel %vm47, %v51, %v53
    %56 = vst [vmem:[#allocation7] sm:$0xff] %v54
    %57 = vst [vmem:[#allocation7 + $0x8] sm:$0xff] %v55
    // Predicated region
    $region18: #{tpu_custom_call.1} parent=1 // pred_check
      _
    $region19: #{tpu_custom_call.1} parent=1 // pred_check_branch
      %59 = sbr.rel (0) target = $region21
    $region20: #{tpu_custom_call.1} parent=1 // pred_region
      %61 = vsyncadd [#allocation4], 0
      %s63 = sshll.u32 [#allocation7], 4
      %s64 = int_to_ptr.vmem [resolvable:$true] %s63
      %s65 = sshll.u32 %s2, 4
      %s66 = int_to_ptr.hbm [resolvable:$true] %s65
      %68 = dma.vmem_to_hbm [thread:$0]  %s64, 256, %s66, [#allocation4]
    $region21: #{tpu_custom_call.1} parent=1 // pred_fallthru
      _
    // Predicated region
    $region22: #{tpu_custom_call.1} parent=1 // pred_check
      _
    $region23: #{tpu_custom_call.1} parent=1 // pred_check_branch
      %70 = sbr.rel (0) target = $region25
    $region24: #{tpu_custom_call.1} parent=1 // pred_region
      %72 = dma.done [#allocation4], 256
    $region25: #{tpu_custom_call.1} parent=1 // pred_fallthru
      _
    %73 = vsyncpa [#allocation3], 1
    %74 = vsyncpa [#allocation6], 1
    %75 = vsyncpa [#allocation4], 1

</llo_original>
